<compile_context>
chip_gen: v6e
topology: v6e:2x2x1
jax: 0.10.0
libtpu: 0.0.40
codegen_flags: <defaults>
</compile_context>

<pallas_src>
import functools

import jax
import jax.numpy as jnp
from jax.experimental import pallas as pl
from jax.experimental.pallas import tpu as pltpu

BN_EPS = 1e-5
LANE = 128


def _round_up(n, m=LANE):
    return ((n + m - 1) // m) * m


@functools.lru_cache(maxsize=1)
def _physical_vmem_bytes():
    """Per-TensorCore physical VMEM; conservative fallback = v7x (64 MiB)."""
    try:
        return int(pltpu.get_tpu_info().vmem_capacity_bytes)
    except Exception:
        return 64 << 20


# ---------------------------------------------------------------------------
# Kernel: fused (Linear -> BatchNorm1d(train) -> ReLU) x2 -> Linear -> ReLU
# ---------------------------------------------------------------------------
def _mlp_kernel(x_ref, w_ref, p_ref, out_ref, *, nf_p, h1_p, h2_p, nc_p):
    mm_dtype = w_ref.dtype                      # f32 or bf16 MXU operand dtype

    # Static, tile-aligned views into the single concatenated weight slab.
    w1 = w_ref[0:nf_p, 0:h1_p]
    w2 = w_ref[0:h1_p, h1_p:h1_p + h2_p]
    w3 = w_ref[0:h2_p, h1_p + h2_p:h1_p + h2_p + nc_p]

    # Packed small per-feature vectors (single tiny DMA instead of five).
    # Padded lanes of gamma/beta/b3 are ZERO -> padded feature lanes stay 0.
    p = p_ref[...]                              # (8, F_max) f32
    g1, be1 = p[0:1, :h1_p], p[1:2, :h1_p]
    g2, be2 = p[2:3, :h2_p], p[3:4, :h2_p]
    b3 = p[4:5, :nc_p]

    def linear(h, w):
        return jnp.dot(h.astype(mm_dtype), w, preferred_element_type=jnp.float32)

    def bn_relu(h, gamma, beta):
        # training-mode BatchNorm1d over the REAL (unpadded) batch axis,
        # one-pass E[h^2] - mean^2 variance, folded into scale/shift.
        mean = jnp.mean(h, axis=0, keepdims=True)
        ex2 = jnp.mean(h * h, axis=0, keepdims=True)
        var = jnp.maximum(ex2 - mean * mean, 0.0)
        scale = gamma * jax.lax.rsqrt(var + BN_EPS)   # (1, F) — EUP rsqrt
        shift = beta - mean * scale                   # (1, F)
        return jnp.maximum(h * scale + shift, 0.0)

    # b1/b2 intentionally absent: BN subtracts the batch mean, cancelling them.
    h = bn_relu(linear(x_ref[...], w1), g1, be1)
    h = bn_relu(linear(h, w2), g2, be2)
    h = jnp.maximum(linear(h, w3) + b3, 0.0)    # model_type != 'classification'

    out_ref[...] = h.astype(out_ref.dtype)


# ---------------------------------------------------------------------------
# One-time weight preparation (hoisted out of the per-call path)
# ---------------------------------------------------------------------------
def prepare_params(params, matmul_dtype=jnp.bfloat16):
    """Pad to 128-lane multiples, pack everything into two device-resident
    slabs (weights + per-feature vectors). Run ONCE per set of weights."""
    (w1, b1, g1, be1, w2, b2, g2, be2, w3, b3) = params
    del b1, b2  # exactly cancelled by training-mode BatchNorm mean subtraction

    nf, h1 = w1.shape
    h2 = w2.shape[1]
    nc = w3.shape[1]
    nf_p, h1_p, h2_p, nc_p = (_round_up(d) for d in (nf, h1, h2, nc))
    r_max = max(nf_p, h1_p, h2_p)
    f_max = max(h1_p, h2_p, nc_p)

    # Single concatenated weight slab, zero-padded rows/cols (exactness relies
    # on the padded activation lanes being zero, guaranteed by gamma zero-pad).
    w_slab = jnp.zeros((r_max, h1_p + h2_p + nc_p), jnp.float32)
    w_slab = w_slab.at[:nf, 0:h1].set(w1)
    w_slab = w_slab.at[:h1, h1_p:h1_p + h2].set(w2)
    w_slab = w_slab.at[:h2, h1_p + h2_p:h1_p + h2_p + nc].set(w3)
    w_slab = w_slab.astype(matmul_dtype)

    packed = jnp.zeros((8, f_max), jnp.float32)
    packed = packed.at[0, :h1].set(g1.reshape(-1))
    packed = packed.at[1, :h1].set(be1.reshape(-1))
    packed = packed.at[2, :h2].set(g2.reshape(-1))
    packed = packed.at[3, :h2].set(be2.reshape(-1))
    packed = packed.at[4, :nc].set(b3.reshape(-1))

    dims = (nf, nc, nf_p, h1_p, h2_p, nc_p)
    return jax.device_put(w_slab), jax.device_put(packed), dims


# ---------------------------------------------------------------------------
# Per-call forward (only x handling left on the hot path)
# ---------------------------------------------------------------------------
@functools.partial(jax.jit, static_argnames=("dims",))
def feedforward_forward(x_cont, w_slab, packed, dims):
    """Whole forward pass in a single fused gridless Pallas call."""
    nf, nc, nf_p, h1_p, h2_p, nc_p = dims
    batch = x_cont.shape[0]

    # Lane-pad x only (batch axis deliberately NOT padded: BN stats are over
    # the real batch), cast once to the MXU operand dtype.
    xp = jnp.pad(x_cont, ((0, 0), (0, nf_p - nf))).astype(w_slab.dtype)

    # Per-generation scoped-VMEM budget: ~80% of physical VMEM as the ceiling.
    itm = lambda a: int(a.size) * a.dtype.itemsize
    bytes_in = itm(xp) + itm(w_slab) + itm(packed)
    act_bytes = batch * (h1_p + h2_p + nc_p + nc_p) * 4
    need = 2 * (bytes_in + act_bytes) + (4 << 20)
    cap = int(0.8 * _physical_vmem_bytes())
    vmem_limit = int(min(max(need, 16 << 20), cap))

    flops = 2 * batch * (nf_p * h1_p + h1_p * h2_p + h2_p * nc_p)
    cost = pl.CostEstimate(flops=flops, transcendentals=h1_p + h2_p,
                           bytes_accessed=bytes_in + batch * nc_p * 4)

    kernel = functools.partial(_mlp_kernel, nf_p=nf_p, h1_p=h1_p,
                               h2_p=h2_p, nc_p=nc_p)

    out_p = pl.pallas_call(
        kernel,
        out_shape=jax.ShapeDtypeStruct((batch, nc_p), jnp.float32),
        in_specs=[pl.BlockSpec(memory_space=pltpu.MemorySpace.VMEM)] * 3,
        out_specs=pl.BlockSpec(memory_space=pltpu.MemorySpace.VMEM),
        compiler_params=pltpu.CompilerParams(vmem_limit_bytes=vmem_limit),
        cost_estimate=cost,
    )(xp, w_slab, packed)

    # TODO(synk): if batch*hidden ever exceeds VMEM, add a feature- or
    # batch-tiled grid (feature tiling is exact for per-feature BN stats),
    # size tiles per generation (v7x has half the VMEM of v6e) and mark the
    # independent axis "parallel" so v7x's second TensorCore is used.
    return out_p[:, :nc]


# ---------------------------------------------------------------------------
# Init & reference (match the PyTorch module)
# ---------------------------------------------------------------------------
def init_params(key, num_features, hidden_layers, num_class):
    """Mirror the PyTorch module init: kaiming_normal_ Linear weights (fan_in,
    gain sqrt(2)), zero Linear biases, BatchNorm1d gamma=1 / beta=0.
    Weights are returned pre-transposed to (in_features, out_features)."""
    dims = [num_features] + hidden_layers + [num_class]
    keys = jax.random.split(key, len(dims) - 1)
    params = []
    for i in range(len(dims) - 1):
        fan_in, fan_out = dims[i], dims[i + 1]
        std = (2.0 / fan_in) ** 0.5
        w = std * jax.random.normal(keys[i], (fan_in, fan_out), dtype=jnp.float32)
        b = jnp.zeros((1, fan_out), dtype=jnp.float32)
        params.append(w)
        params.append(b)
        if i < len(dims) - 2:  # BatchNorm1d after every layer except the last
            params.append(jnp.ones((1, fan_out), dtype=jnp.float32))   # gamma
            params.append(jnp.zeros((1, fan_out), dtype=jnp.float32))  # beta
    return tuple(params)


def reference_forward(x, params):
    """Pure-JAX reference matching the PyTorch forward (includes b1/b2 to
    confirm they are cancelled by training-mode BN)."""
    (w1, b1, g1, be1, w2, b2, g2, be2, w3, b3) = params

    def bn(h, g, be):
        m = jnp.mean(h, axis=0, keepdims=True)
        v = jnp.mean((h - m) ** 2, axis=0, keepdims=True)
        return (h - m) / jnp.sqrt(v + BN_EPS) * g + be

    h = jnp.maximum(bn(x @ w1 + b1, g1, be1), 0.0)
    h = jnp.maximum(bn(h @ w2 + b2, g2, be2), 0.0)
    return jnp.maximum(h @ w3 + b3, 0.0)


if __name__ == "__main__":
    # Small shapes consistent with the module's forward:
    #   num_features=16, hidden_layers=[32, 32], num_class=4, batch=8
    batch, num_features, hidden_layers, num_class = 8, 16, [32, 32], 4

    key = jax.random.PRNGKey(0)
    k_x, k_p = jax.random.split(key)
    x_cont = jax.random.normal(k_x, (batch, num_features), dtype=jnp.float32)
    params = init_params(k_p, num_features, hidden_layers, num_class)

    ref = reference_forward(x_cont, params)

    # f32 MXU operands — bit-faithful to the PyTorch semantics.
    w32, p32, dims = prepare_params(params, matmul_dtype=jnp.float32)
    out = jax.block_until_ready(feedforward_forward(x_cont, w32, p32, dims))
    assert out.shape == (batch, num_class)
    assert jnp.allclose(out, ref, atol=1e-4, rtol=1e-4)

    # Default bf16 MXU-operand fast path (BN/ReLU/accumulation stay f32).
    w16, p16, dims16 = prepare_params(params)
    out_bf16 = jax.block_until_ready(feedforward_forward(x_cont, w16, p16, dims16))
    assert out_bf16.shape == (batch, num_class)
    assert jnp.allclose(out_bf16, ref, atol=5e-2, rtol=5e-2)

    # TODO(synk): embedding / dropout branches of forward() and the softmax
    # 'classification' head are not exercised (embedding_data=None,
    # dropout=None, regression model_type), matching the simplest config.
    print("KERNEL_OK")
</pallas_src>

<mosaic_0001>
module attributes {stable_mosaic.version = 11 : i64} {
  func.func @_mlp_kernel(%arg0: memref<8x128xf32, #tpu.memory_space<vmem>>, %arg1: memref<128x384xf32, #tpu.memory_space<vmem>>, %arg2: memref<8x128xf32, #tpu.memory_space<vmem>>, %arg3: memref<8x128xf32, #tpu.memory_space<vmem>>) attributes {dimension_semantics = [], scalar_prefetch = 0 : i64, scratch_operands = 0 : i64, tpu.core_type = #tpu.core_type<tc>} {
    %c0 = arith.constant 0 : index
    %c0_0 = arith.constant 0 : index
    %0 = vector.load %arg1[%c0, %c0_0] : memref<128x384xf32, #tpu.memory_space<vmem>>, vector<128x128xf32>
    %c0_1 = arith.constant 0 : index
    %c128 = arith.constant 128 : index
    %1 = vector.load %arg1[%c0_1, %c128] : memref<128x384xf32, #tpu.memory_space<vmem>>, vector<128x128xf32>
    %c0_2 = arith.constant 0 : index
    %c256 = arith.constant 256 : index
    %2 = vector.load %arg1[%c0_2, %c256] : memref<128x384xf32, #tpu.memory_space<vmem>>, vector<128x128xf32>
    %c0_3 = arith.constant 0 : index
    %c0_4 = arith.constant 0 : index
    %3 = vector.load %arg2[%c0_3, %c0_4] : memref<8x128xf32, #tpu.memory_space<vmem>>, vector<8x128xf32>
    %4 = vector.extract_strided_slice %3 {offsets = [0, 0], sizes = [1, 128], strides = [1, 1]} : vector<8x128xf32> to vector<1x128xf32>
    %5 = vector.extract_strided_slice %3 {offsets = [1, 0], sizes = [1, 128], strides = [1, 1]} : vector<8x128xf32> to vector<1x128xf32>
    %6 = vector.extract_strided_slice %3 {offsets = [2, 0], sizes = [1, 128], strides = [1, 1]} : vector<8x128xf32> to vector<1x128xf32>
    %7 = vector.extract_strided_slice %3 {offsets = [3, 0], sizes = [1, 128], strides = [1, 1]} : vector<8x128xf32> to vector<1x128xf32>
    %8 = vector.extract_strided_slice %3 {offsets = [4, 0], sizes = [1, 128], strides = [1, 1]} : vector<8x128xf32> to vector<1x128xf32>
    %c0_5 = arith.constant 0 : index
    %c0_6 = arith.constant 0 : index
    %9 = vector.load %arg0[%c0_5, %c0_6] : memref<8x128xf32, #tpu.memory_space<vmem>>, vector<8x128xf32>
    %cst = arith.constant dense<0.000000e+00> : vector<8x128xf32>
    %10 = tpu.matmul %9, %0, %cst {dimension_numbers = #tpu.dot_dimension_numbers<[1], [0], [0], [1], [0, 0, 1, 1], [], []>} : vector<8x128xf32>, vector<128x128xf32>, vector<8x128xf32> -> vector<8x128xf32>
    %cst_7 = arith.constant dense<0.000000e+00> : vector<128xf32>
    %11 = vector.multi_reduction <add>, %10, %cst_7 [0] : vector<8x128xf32> to vector<128xf32>
    %12 = vector.shape_cast %11 : vector<128xf32> to vector<1x128xf32>
    %cst_8 = arith.constant 8.000000e+00 : f32
    %13 = vector.broadcast %cst_8 : f32 to vector<1x128xf32>
    %14 = arith.divf %12, %13 : vector<1x128xf32>
    %15 = arith.mulf %10, %10 : vector<8x128xf32>
    %cst_9 = arith.constant dense<0.000000e+00> : vector<128xf32>
    %16 = vector.multi_reduction <add>, %15, %cst_9 [0] : vector<8x128xf32> to vector<128xf32>
    %17 = vector.shape_cast %16 : vector<128xf32> to vector<1x128xf32>
    %cst_10 = arith.constant 8.000000e+00 : f32
    %18 = vector.broadcast %cst_10 : f32 to vector<1x128xf32>
    %19 = arith.divf %17, %18 : vector<1x128xf32>
    %20 = arith.mulf %14, %14 : vector<1x128xf32>
    %21 = arith.subf %19, %20 : vector<1x128xf32>
    %cst_11 = arith.constant 0.000000e+00 : f32
    %22 = vector.broadcast %cst_11 : f32 to vector<1x128xf32>
    %23 = arith.maximumf %21, %22 : vector<1x128xf32>
    %cst_12 = arith.constant 9.99999974E-6 : f32
    %24 = vector.broadcast %cst_12 : f32 to vector<1x128xf32>
    %25 = arith.addf %23, %24 : vector<1x128xf32>
    %26 = math.rsqrt %25 : vector<1x128xf32>
    %27 = arith.mulf %4, %26 : vector<1x128xf32>
    %28 = arith.mulf %14, %27 : vector<1x128xf32>
    %29 = arith.subf %5, %28 : vector<1x128xf32>
    %30 = vector.broadcast %27 : vector<1x128xf32> to vector<8x128xf32>
    %31 = arith.mulf %10, %30 : vector<8x128xf32>
    %32 = vector.broadcast %29 : vector<1x128xf32> to vector<8x128xf32>
    %33 = arith.addf %31, %32 : vector<8x128xf32>
    %cst_13 = arith.constant 0.000000e+00 : f32
    %34 = vector.broadcast %cst_13 : f32 to vector<8x128xf32>
    %35 = arith.maximumf %33, %34 : vector<8x128xf32>
    %cst_14 = arith.constant dense<0.000000e+00> : vector<8x128xf32>
    %36 = tpu.matmul %35, %1, %cst_14 {dimension_numbers = #tpu.dot_dimension_numbers<[1], [0], [0], [1], [0, 0, 1, 1], [], []>} : vector<8x128xf32>, vector<128x128xf32>, vector<8x128xf32> -> vector<8x128xf32>
    %cst_15 = arith.constant dense<0.000000e+00> : vector<128xf32>
    %37 = vector.multi_reduction <add>, %36, %cst_15 [0] : vector<8x128xf32> to vector<128xf32>
    %38 = vector.shape_cast %37 : vector<128xf32> to vector<1x128xf32>
    %cst_16 = arith.constant 8.000000e+00 : f32
    %39 = vector.broadcast %cst_16 : f32 to vector<1x128xf32>
    %40 = arith.divf %38, %39 : vector<1x128xf32>
    %41 = arith.mulf %36, %36 : vector<8x128xf32>
    %cst_17 = arith.constant dense<0.000000e+00> : vector<128xf32>
    %42 = vector.multi_reduction <add>, %41, %cst_17 [0] : vector<8x128xf32> to vector<128xf32>
    %43 = vector.shape_cast %42 : vector<128xf32> to vector<1x128xf32>
    %cst_18 = arith.constant 8.000000e+00 : f32
    %44 = vector.broadcast %cst_18 : f32 to vector<1x128xf32>
    %45 = arith.divf %43, %44 : vector<1x128xf32>
    %46 = arith.mulf %40, %40 : vector<1x128xf32>
    %47 = arith.subf %45, %46 : vector<1x128xf32>
    %cst_19 = arith.constant 0.000000e+00 : f32
    %48 = vector.broadcast %cst_19 : f32 to vector<1x128xf32>
    %49 = arith.maximumf %47, %48 : vector<1x128xf32>
    %cst_20 = arith.constant 9.99999974E-6 : f32
    %50 = vector.broadcast %cst_20 : f32 to vector<1x128xf32>
    %51 = arith.addf %49, %50 : vector<1x128xf32>
    %52 = math.rsqrt %51 : vector<1x128xf32>
    %53 = arith.mulf %6, %52 : vector<1x128xf32>
    %54 = arith.mulf %40, %53 : vector<1x128xf32>
    %55 = arith.subf %7, %54 : vector<1x128xf32>
    %56 = vector.broadcast %53 : vector<1x128xf32> to vector<8x128xf32>
    %57 = arith.mulf %36, %56 : vector<8x128xf32>
    %58 = vector.broadcast %55 : vector<1x128xf32> to vector<8x128xf32>
    %59 = arith.addf %57, %58 : vector<8x128xf32>
    %cst_21 = arith.constant 0.000000e+00 : f32
    %60 = vector.broadcast %cst_21 : f32 to vector<8x128xf32>
    %61 = arith.maximumf %59, %60 : vector<8x128xf32>
    %cst_22 = arith.constant dense<0.000000e+00> : vector<8x128xf32>
    %62 = tpu.matmul %61, %2, %cst_22 {dimension_numbers = #tpu.dot_dimension_numbers<[1], [0], [0], [1], [0, 0, 1, 1], [], []>} : vector<8x128xf32>, vector<128x128xf32>, vector<8x128xf32> -> vector<8x128xf32>
    %63 = vector.broadcast %8 : vector<1x128xf32> to vector<8x128xf32>
    %64 = arith.addf %62, %63 : vector<8x128xf32>
    %cst_23 = arith.constant 0.000000e+00 : f32
    %65 = vector.broadcast %cst_23 : f32 to vector<8x128xf32>
    %66 = arith.maximumf %64, %65 : vector<8x128xf32>
    %c0_24 = arith.constant 0 : index
    %c0_25 = arith.constant 0 : index
    %67 = vector.load %arg3[%c0_24, %c0_25] : memref<8x128xf32, #tpu.memory_space<vmem>>, vector<8x128xf32>
    tpu.vector_store %arg3[%c0_24, %c0_25], %66 {strides = array<i32>} : memref<8x128xf32, #tpu.memory_space<vmem>>, vector<8x128xf32>,
    return
  }
}

</mosaic_0001>

<llo_original>
// kernel: feedforward_forward.1
$region0: #{feedforward_forward.1}
  #allocation0 [shape = 'u32[]', space=smem, size = 0x4, offset = 0x4, fixed_abs, tag = 'smem constant byte address 0x4 - core index']
  #allocation1 [shape = 'u32[144,128]{1,0:T(1,128)}', space=vmem, size = 0x12000, scoped, tag = 'internal scratch']
  %s0 = inlined_call_operand.vmem [shape: f32[8,128], index: 0, kind: input, shape index: {}]
  %s1 = inlined_call_operand.hbm [shape: f32[128,384], index: 1, kind: input, shape index: {}]
  %s2 = inlined_call_operand.vmem [shape: f32[8,128], index: 2, kind: input, shape index: {}]
  %s3 = inlined_call_operand.vmem [shape: f32[8,128], index: 3, kind: output, shape index: {}]
  %s4 = sld [smem:[#allocation0]]
  $region26: #{feedforward_forward.1} parent=0
    _
  %s6 = ssub.s32 1, %s4
  %s7 = scalar_select 0, %s6, %s4
  $region1: #{feedforward_forward.1} parent=0
    #allocation2 [shape = 'u8[196608]{0}', space=vmem, size = 0x30000, scoped, tag = 'input window, operand 1, single buffered']
    #allocation3 [shape = 's32[1]{0}', space=sflag, size = 0x4, scoped, tag = 'scoped memory for feedforward_forward.1']
    %8 = vsyncpa [#allocation3], 0
    // Predicated region
    $region2: #{feedforward_forward.1} parent=1 // pred_check
      _
    $region3: #{feedforward_forward.1} parent=1 // pred_check_branch
      %10 = sbr.rel (0) target = $region5
    $region4: #{feedforward_forward.1} parent=1 // pred_region
      _
    $region5: #{feedforward_forward.1} parent=1 // pred_fallthru
      _
    // Predicated region
    $region6: #{feedforward_forward.1} parent=1 // pred_check
      _
    $region7: #{feedforward_forward.1} parent=1 // pred_check_branch
      %12 = sbr.rel (0) target = $region9
    $region8: #{feedforward_forward.1} parent=1 // pred_region
      %s14 = ssub.s32 6144, 6144
      %15 = vsyncadd [#allocation3], %s14
      %s16 = sshll.u32 [#allocation2], 4
      %s17 = int_to_ptr.vmem [resolvable:$true] %s16
      %22 = dma.hbm_to_vmem [thread:$0]  %s1, 6144, %s17, [#allocation3], 384, 384, 24
    $region9: #{feedforward_forward.1} parent=1 // pred_fallthru
      _
    // Predicated region
    $region10: #{feedforward_forward.1} parent=1 // pred_check
      _
    $region11: #{feedforward_forward.1} parent=1 // pred_check_branch
      %24 = sbr.rel (0) target = $region13
    $region12: #{feedforward_forward.1} parent=1 // pred_region
      _
    $region13: #{feedforward_forward.1} parent=1 // pred_fallthru
      _
    // Predicated region
    $region14: #{feedforward_forward.1} parent=1 // pred_check
      _
    $region15: #{feedforward_forward.1} parent=1 // pred_check_branch
      %26 = sbr.rel (0) target = $region17
    $region16: #{feedforward_forward.1} parent=1 // pred_region
      %27 = dma.done [#allocation3], 6144
    $region17: #{feedforward_forward.1} parent=1 // pred_fallthru
      _
    %v28 = vld [vmem:[#allocation2] sm:$0xff]
    %v29 = vld [vmem:[#allocation2 + $0x18] sm:$0xff]
    %v30 = vld [vmem:[#allocation2 + $0x30] sm:$0xff]
    %v31 = vld [vmem:[#allocation2 + $0x48] sm:$0xff]
    %v32 = vld [vmem:[#allocation2 + $0x60] sm:$0xff]
    %v33 = vld [vmem:[#allocation2 + $0x78] sm:$0xff]
    %v34 = vld [vmem:[#allocation2 + $0x90] sm:$0xff]
    %v35 = vld [vmem:[#allocation2 + $0xa8] sm:$0xff]
    %v36 = vld [vmem:[#allocation2 + $0xc0] sm:$0xff]
    %v37 = vld [vmem:[#allocation2 + $0xd8] sm:$0xff]
    %v38 = vld [vmem:[#allocation2 + $0xf0] sm:$0xff]
    %v39 = vld [vmem:[#allocation2 + $0x108] sm:$0xff]
    %v40 = vld [vmem:[#allocation2 + $0x120] sm:$0xff]
    %v41 = vld [vmem:[#allocation2 + $0x138] sm:$0xff]
    %v42 = vld [vmem:[#allocation2 + $0x150] sm:$0xff]
    %v43 = vld [vmem:[#allocation2 + $0x168] sm:$0xff]
    %v44 = vld [vmem:[#allocation2 + $0x8] sm:$0xff]
    %v45 = vld [vmem:[#allocation2 + $0x20] sm:$0xff]
    %v46 = vld [vmem:[#allocation2 + $0x38] sm:$0xff]
    %v47 = vld [vmem:[#allocation2 + $0x50] sm:$0xff]
    %v48 = vld [vmem:[#allocation2 + $0x68] sm:$0xff]
    %v49 = vld [vmem:[#allocation2 + $0x80] sm:$0xff]
    %v50 = vld [vmem:[#allocation2 + $0x98] sm:$0xff]
    %v51 = vld [vmem:[#allocation2 + $0xb0] sm:$0xff]
    %v52 = vld [vmem:[#allocation2 + $0xc8] sm:$0xff]
    %v53 = vld [vmem:[#allocation2 + $0xe0] sm:$0xff]
    %v54 = vld [vmem:[#allocation2 + $0xf8] sm:$0xff]
    %v55 = vld [vmem:[#allocation2 + $0x110] sm:$0xff]
    %v56 = vld [vmem:[#allocation2 + $0x128] sm:$0xff]
    %v57 = vld [vmem:[#allocation2 + $0x140] sm:$0xff]
    %v58 = vld [vmem:[#allocation2 + $0x158] sm:$0xff]
    %v59 = vld [vmem:[#allocation2 + $0x170] sm:$0xff]
    %v60 = vld [vmem:[#allocation2 + $0x10] sm:$0xff]
    %v61 = vld [vmem:[#allocation2 + $0x28] sm:$0xff]
    %v62 = vld [vmem:[#allocation2 + $0x40] sm:$0xff]
    %v63 = vld [vmem:[#allocation2 + $0x58] sm:$0xff]
    %v64 = vld [vmem:[#allocation2 + $0x70] sm:$0xff]
    %v65 = vld [vmem:[#allocation2 + $0x88] sm:$0xff]
    %v66 = vld [vmem:[#allocation2 + $0xa0] sm:$0xff]
    %v67 = vld [vmem:[#allocation2 + $0xb8] sm:$0xff]
    %v68 = vld [vmem:[#allocation2 + $0xd0] sm:$0xff]
    %v69 = vld [vmem:[#allocation2 + $0xe8] sm:$0xff]
    %v70 = vld [vmem:[#allocation2 + $0x100] sm:$0xff]
    %v71 = vld [vmem:[#allocation2 + $0x118] sm:$0xff]
    %v72 = vld [vmem:[#allocation2 + $0x130] sm:$0xff]
    %v73 = vld [vmem:[#allocation2 + $0x148] sm:$0xff]
    %v74 = vld [vmem:[#allocation2 + $0x160] sm:$0xff]
    %v75 = vld [vmem:[#allocation2 + $0x178] sm:$0xff]
    %v76 = vld [vmem:[%s2] sm:$0xff]
    %v77 = vld [vmem:[%s0] sm:$0xff]
    %78 = vmatprep.subr.mxu0 0.0
    %79 = vmatpush1.msra.mxu0 %v43
    %80 = vmatprep.subr.mxu0 0.0
    %81 = vmatpush1.msra.mxu0 %v42
    %82 = vmatprep.subr.mxu0 0.0
    %83 = vmatpush1.msra.mxu0 %v41
    %84 = vmatprep.subr.mxu0 0.0
    %85 = vmatpush1.msra.mxu0 %v40
    %86 = vmatprep.subr.mxu0 0.0
    %87 = vmatpush1.msra.mxu0 %v39
    %88 = vmatprep.subr.mxu0 0.0
    %89 = vmatpush1.msra.mxu0 %v38
    %90 = vmatprep.subr.mxu0 0.0
    %91 = vmatpush1.msra.mxu0 %v37
    %92 = vmatprep.subr.mxu0 0.0
    %93 = vmatpush1.msra.mxu0 %v36
    %94 = vmatprep.subr.mxu0 0.0
    %95 = vmatpush1.msra.mxu0 %v35
    %96 = vmatprep.subr.mxu0 0.0
    %97 = vmatpush1.msra.mxu0 %v34
    %98 = vmatprep.subr.mxu0 0.0
    %99 = vmatpush1.msra.mxu0 %v33
    %100 = vmatprep.subr.mxu0 0.0
    %101 = vmatpush1.msra.mxu0 %v32
    %102 = vmatprep.subr.mxu0 0.0
    %103 = vmatpush1.msra.mxu0 %v31
    %104 = vmatprep.subr.mxu0 0.0
    %105 = vmatpush1.msra.mxu0 %v30
    %106 = vmatprep.subr.mxu0 0.0
    %107 = vmatpush1.msra.mxu0 %v29
    %108 = vmatprep.subr.mxu0 0.0
    %109 = vmatpush1.msra.mxu0 %v28
    %110 = vmatprep.subr.mxu0 0.0
    %111 = vmatpush2.msra.mxu0 0.0
    %112 = vmatprep.subr.mxu0 0.0
    %113 = vmatpush2.msra.mxu0 0.0
    %114 = vmatprep.subr.mxu0 0.0
    %115 = vmatpush2.msra.mxu0 0.0
    %116 = vmatprep.subr.mxu0 0.0
    %117 = vmatpush2.msra.mxu0 0.0
    %118 = vmatprep.subr.mxu0 0.0
    %119 = vmatpush2.msra.mxu0 0.0
    %120 = vmatprep.subr.mxu0 0.0
    %121 = vmatpush2.msra.mxu0 0.0
    %122 = vmatprep.subr.mxu0 0.0
    %123 = vmatpush2.msra.mxu0 0.0
    %124 = vmatprep.subr.mxu0 0.0
    %125 = vmatpush2.msra.mxu0 0.0
    %126 = vmatprep.subr.mxu0 0.0
    %127 = vmatpush2.msra.mxu0 0.0
    %128 = vmatprep.subr.mxu0 0.0
    %129 = vmatpush2.msra.mxu0 0.0
    %130 = vmatprep.subr.mxu0 0.0
    %131 = vmatpush2.msra.mxu0 0.0
    %132 = vmatprep.subr.mxu0 0.0
    %133 = vmatpush2.msra.mxu0 0.0
    %134 = vmatprep.subr.mxu0 0.0
    %135 = vmatpush2.msra.mxu0 0.0
    %136 = vmatprep.subr.mxu0 0.0
    %137 = vmatpush2.msra.mxu0 0.0
    %138 = vmatprep.subr.mxu0 0.0
    %139 = vmatpush2.msra.mxu0 0.0
    %140 = vmatprep.subr.mxu0 0.0
    %141 = vmatpush2.msra.mxu0 0.0
    %142 = vmatprep.mubr.f32.mxu0 0.0
    %143 = vmatmul.mubr.f32.gmra.mxu0 %v77
    %v144 = vpop.f32.mrf.mxu0
    %v145 = vadd.f32 0.0, %v144
    %v146 = vpop.f32.mrf.mxu0
    %147 = vdwg.mxu0
    %v148 = vrot.slane %v145, 4
    %v149 = vadd.f32 %v145, %v148
    %v150 = vrot.slane %v149, 2
    %v151 = vadd.f32 %v149, %v150
    %v152 = vrot.slane %v151, 1
    %v153 = vadd.f32 %v151, %v152
    %v154 = vrcp.pop 8.0
    %v155 = vmul.f32 %v153, %v154
    %v156 = vmul.f32 %v145, %v145
    %v157 = vrot.slane %v156, 4
    %v158 = vadd.f32 %v156, %v157
    %v159 = vrot.slane %v158, 2
    %v160 = vadd.f32 %v158, %v159
    %v161 = vrot.slane %v160, 1
    %v162 = vadd.f32 %v160, %v161
    %v163 = vmul.f32 %v162, %v154
    %v164 = vmul.f32 %v155, %v155
    %v165 = vsub.f32 %v163, %v164
    %v166 = vmax.f32 %v165, 0.0
    %v167 = vadd.f32 %v166, 1e-05
    %v168 = vrsqrt.pop %v167
    %v169 = vmul.f32 %v76, %v168
    %v170 = vmul.f32 %v155, %v169
    %v172 = vrot.slane %v170, 7
    %v174 = vsub.f32 %v76, %v172
    %v175 = vlaneseq
    %v176 = vshrl.u32 %v175, 7
    %v177 = vsub.s32 0, %v176
    %v178 = vrot.slane %v169, %v177
    %v179 = vmul.f32 %v145, %v178
    %v180 = vlaneseq
    %v181 = vshrl.u32 %v180, 7
    %v182 = vsub.s32 1, %v181
    %v183 = vrot.slane %v174, %v182
    %v184 = vadd.f32 %v179, %v183
    %v185 = vmax.f32 %v184, 0.0
    %186 = vmatprep.subr.mxu0 0.0
    %187 = vmatpush1.msra.mxu0 %v59
    %188 = vmatprep.subr.mxu0 0.0
    %189 = vmatpush1.msra.mxu0 %v58
    %190 = vmatprep.subr.mxu0 0.0
    %191 = vmatpush1.msra.mxu0 %v57
    %192 = vmatprep.subr.mxu0 0.0
    %193 = vmatpush1.msra.mxu0 %v56
    %194 = vmatprep.subr.mxu0 0.0
    %195 = vmatpush1.msra.mxu0 %v55
    %196 = vmatprep.subr.mxu0 0.0
    %197 = vmatpush1.msra.mxu0 %v54
    %198 = vmatprep.subr.mxu0 0.0
    %199 = vmatpush1.msra.mxu0 %v53
    %200 = vmatprep.subr.mxu0 0.0
    %201 = vmatpush1.msra.mxu0 %v52
    %202 = vmatprep.subr.mxu0 0.0
    %203 = vmatpush1.msra.mxu0 %v51
    %204 = vmatprep.subr.mxu0 0.0
    %205 = vmatpush1.msra.mxu0 %v50
    %206 = vmatprep.subr.mxu0 0.0
    %207 = vmatpush1.msra.mxu0 %v49
    %208 = vmatprep.subr.mxu0 0.0
    %209 = vmatpush1.msra.mxu0 %v48
    %210 = vmatprep.subr.mxu0 0.0
    %211 = vmatpush1.msra.mxu0 %v47
    %212 = vmatprep.subr.mxu0 0.0
    %213 = vmatpush1.msra.mxu0 %v46
    %214 = vmatprep.subr.mxu0 0.0
    %215 = vmatpush1.msra.mxu0 %v45
    %216 = vmatprep.subr.mxu0 0.0
    %217 = vmatpush1.msra.mxu0 %v44
    %218 = vmatprep.subr.mxu0 0.0
    %219 = vmatpush2.msra.mxu0 0.0
    %220 = vmatprep.subr.mxu0 0.0
    %221 = vmatpush2.msra.mxu0 0.0
    %222 = vmatprep.subr.mxu0 0.0
    %223 = vmatpush2.msra.mxu0 0.0
    %224 = vmatprep.subr.mxu0 0.0
    %225 = vmatpush2.msra.mxu0 0.0
    %226 = vmatprep.subr.mxu0 0.0
    %227 = vmatpush2.msra.mxu0 0.0
    %228 = vmatprep.subr.mxu0 0.0
    %229 = vmatpush2.msra.mxu0 0.0
    %230 = vmatprep.subr.mxu0 0.0
    %231 = vmatpush2.msra.mxu0 0.0
    %232 = vmatprep.subr.mxu0 0.0
    %233 = vmatpush2.msra.mxu0 0.0
    %234 = vmatprep.subr.mxu0 0.0
    %235 = vmatpush2.msra.mxu0 0.0
    %236 = vmatprep.subr.mxu0 0.0
    %237 = vmatpush2.msra.mxu0 0.0
    %238 = vmatprep.subr.mxu0 0.0
    %239 = vmatpush2.msra.mxu0 0.0
    %240 = vmatprep.subr.mxu0 0.0
    %241 = vmatpush2.msra.mxu0 0.0
    %242 = vmatprep.subr.mxu0 0.0
    %243 = vmatpush2.msra.mxu0 0.0
    %244 = vmatprep.subr.mxu0 0.0
    %245 = vmatpush2.msra.mxu0 0.0
    %246 = vmatprep.subr.mxu0 0.0
    %247 = vmatpush2.msra.mxu0 0.0
    %248 = vmatprep.subr.mxu0 0.0
    %249 = vmatpush2.msra.mxu0 0.0
    %250 = vmatprep.mubr.f32.mxu0 0.0
    %251 = vmatmul.mubr.f32.gmra.mxu0 %v185
    %v252 = vpop.f32.mrf.mxu0
    %v253 = vadd.f32 0.0, %v252
    %v254 = vpop.f32.mrf.mxu0
    %255 = vdwg.mxu0
    %v256 = vrot.slane %v253, 4
    %v257 = vadd.f32 %v253, %v256
    %v258 = vrot.slane %v257, 2
    %v259 = vadd.f32 %v257, %v258
    %v260 = vrot.slane %v259, 1
    %v261 = vadd.f32 %v259, %v260
    %v262 = vmul.f32 %v261, %v154
    %v263 = vmul.f32 %v253, %v253
    %v264 = vrot.slane %v263, 4
    %v265 = vadd.f32 %v263, %v264
    %v266 = vrot.slane %v265, 2
    %v267 = vadd.f32 %v265, %v266
    %v268 = vrot.slane %v267, 1
    %v269 = vadd.f32 %v267, %v268
    %v270 = vmul.f32 %v269, %v154
    %v271 = vmul.f32 %v262, %v262
    %v272 = vsub.f32 %v270, %v271
    %v273 = vmax.f32 %v272, 0.0
    %v274 = vadd.f32 %v273, 1e-05
    %v275 = vrsqrt.pop %v274
    %v276 = vmul.f32 %v76, %v275
    %v277 = vmul.f32 %v262, %v276
    %v279 = vrot.slane %v277, 7
    %v281 = vsub.f32 %v76, %v279
    %v282 = vlaneseq
    %v283 = vshrl.u32 %v282, 7
    %v284 = vsub.s32 2, %v283
    %v285 = vrot.slane %v276, %v284
    %v286 = vmul.f32 %v253, %v285
    %v287 = vlaneseq
    %v288 = vshrl.u32 %v287, 7
    %v289 = vsub.s32 3, %v288
    %v290 = vrot.slane %v281, %v289
    %v291 = vadd.f32 %v286, %v290
    %v292 = vmax.f32 %v291, 0.0
    %v293 = vlaneseq
    %v294 = vshrl.u32 %v293, 7
    %v295 = vsub.s32 4, %v294
    %v296 = vrot.slane %v76, %v295
    %297 = vmatprep.subr.mxu0 0.0
    %298 = vmatpush1.msra.mxu0 %v75
    %299 = vmatprep.subr.mxu0 0.0
    %300 = vmatpush1.msra.mxu0 %v74
    %301 = vmatprep.subr.mxu0 0.0
    %302 = vmatpush1.msra.mxu0 %v73
    %303 = vmatprep.subr.mxu0 0.0
    %304 = vmatpush1.msra.mxu0 %v72
    %305 = vmatprep.subr.mxu0 0.0
    %306 = vmatpush1.msra.mxu0 %v71
    %307 = vmatprep.subr.mxu0 0.0
    %308 = vmatpush1.msra.mxu0 %v70
    %309 = vmatprep.subr.mxu0 0.0
    %310 = vmatpush1.msra.mxu0 %v69
    %311 = vmatprep.subr.mxu0 0.0
    %312 = vmatpush1.msra.mxu0 %v68
    %313 = vmatprep.subr.mxu0 0.0
    %314 = vmatpush1.msra.mxu0 %v67
    %315 = vmatprep.subr.mxu0 0.0
    %316 = vmatpush1.msra.mxu0 %v66
    %317 = vmatprep.subr.mxu0 0.0
    %318 = vmatpush1.msra.mxu0 %v65
    %319 = vmatprep.subr.mxu0 0.0
    %320 = vmatpush1.msra.mxu0 %v64
    %321 = vmatprep.subr.mxu0 0.0
    %322 = vmatpush1.msra.mxu0 %v63
    %323 = vmatprep.subr.mxu0 0.0
    %324 = vmatpush1.msra.mxu0 %v62
    %325 = vmatprep.subr.mxu0 0.0
    %326 = vmatpush1.msra.mxu0 %v61
    %327 = vmatprep.subr.mxu0 0.0
    %328 = vmatpush1.msra.mxu0 %v60
    %329 = vmatprep.subr.mxu0 0.0
    %330 = vmatpush2.msra.mxu0 0.0
    %331 = vmatprep.subr.mxu0 0.0
    %332 = vmatpush2.msra.mxu0 0.0
    %333 = vmatprep.subr.mxu0 0.0
    %334 = vmatpush2.msra.mxu0 0.0
    %335 = vmatprep.subr.mxu0 0.0
    %336 = vmatpush2.msra.mxu0 0.0
    %337 = vmatprep.subr.mxu0 0.0
    %338 = vmatpush2.msra.mxu0 0.0
    %339 = vmatprep.subr.mxu0 0.0
    %340 = vmatpush2.msra.mxu0 0.0
    %341 = vmatprep.subr.mxu0 0.0
    %342 = vmatpush2.msra.mxu0 0.0
    %343 = vmatprep.subr.mxu0 0.0
    %344 = vmatpush2.msra.mxu0 0.0
    %345 = vmatprep.subr.mxu0 0.0
    %346 = vmatpush2.msra.mxu0 0.0
    %347 = vmatprep.subr.mxu0 0.0
    %348 = vmatpush2.msra.mxu0 0.0
    %349 = vmatprep.subr.mxu0 0.0
    %350 = vmatpush2.msra.mxu0 0.0
    %351 = vmatprep.subr.mxu0 0.0
    %352 = vmatpush2.msra.mxu0 0.0
    %353 = vmatprep.subr.mxu0 0.0
    %354 = vmatpush2.msra.mxu0 0.0
    %355 = vmatprep.subr.mxu0 0.0
    %356 = vmatpush2.msra.mxu0 0.0
    %357 = vmatprep.subr.mxu0 0.0
    %358 = vmatpush2.msra.mxu0 0.0
    %359 = vmatprep.subr.mxu0 0.0
    %360 = vmatpush2.msra.mxu0 0.0
    %361 = vmatprep.mubr.f32.mxu0 0.0
    %362 = vmatmul.mubr.f32.gmra.mxu0 %v292
    %v363 = vpop.f32.mrf.mxu0
    %v364 = vadd.f32 %v296, %v363
    %v365 = vpop.f32.mrf.mxu0
    %366 = vdwg.mxu0
    %v367 = vmax.f32 %v364, 0.0
    %368 = vst [vmem:[%s3] sm:$0xff] %v367
    // Predicated region
    $region18: #{feedforward_forward.1} parent=1 // pred_check
      _
    $region19: #{feedforward_forward.1} parent=1 // pred_check_branch
      %370 = sbr.rel (0) target = $region21
    $region20: #{feedforward_forward.1} parent=1 // pred_region
      _
    $region21: #{feedforward_forward.1} parent=1 // pred_fallthru
      _
    // Predicated region
    $region22: #{feedforward_forward.1} parent=1 // pred_check
      _
    $region23: #{feedforward_forward.1} parent=1 // pred_check_branch
      %372 = sbr.rel (0) target = $region25
    $region24: #{feedforward_forward.1} parent=1 // pred_region
      _
    $region25: #{feedforward_forward.1} parent=1 // pred_fallthru
      _
    %373 = vsyncpa [#allocation3], 1

</llo_original>
